<compile_context>
chip_gen: v5e
topology: v5e:2x2
jax: 0.10.0
libtpu: 0.0.40
codegen_flags: <defaults>
</compile_context>

<pallas_src>
import functools

import numpy as np
import jax
import jax.numpy as jnp
from jax.experimental import pallas as pl
from jax.experimental.pallas import tpu as pltpu


def _bce_terms(x, lab, num_classes, ignore_index):
    """Channel-summed stable BCE-with-logits and validity mask, built in-register.

    x:   (C, TN) f32 logits        lab: (1, TN) int32 labels
    returns pix: (1, TN) f32 per-pixel loss (unmasked), valid: (1, TN) f32 mask.
    """
    c_idx = jax.lax.broadcasted_iota(jnp.int32, x.shape, 0)                 # (C, TN)
    onehot = (c_idx == lab).astype(jnp.float32)                             # (C, TN)
    # ignored or out-of-range labels -> all-zero one-hot column (matches the sliced-off
    # extra channel in the PyTorch module) -> masked out of the reduction.
    valid = jnp.logical_and(lab != ignore_index,
                            lab < num_classes).astype(jnp.float32)          # (1, TN)
    # numerically stable: max(x,0) - x*t + log(1 + exp(-|x|))   (exp/log on the EUP)
    bce = jnp.maximum(x, 0.0) - x * onehot + jnp.log(1.0 + jnp.exp(-jnp.abs(x)))
    pix = jnp.sum(bce, axis=0, keepdims=True)                               # XLU sublane reduce
    return pix, valid


def _bce_reduce_kernel(x_ref, lab_ref, loss_ref, cnt_ref, acc_ref, vcnt_ref,
                       *, num_classes, ignore_index):
    j = pl.program_id(1)

    @pl.when(j == 0)
    def _():
        acc_ref[...] = jnp.zeros_like(acc_ref)
        vcnt_ref[...] = jnp.zeros_like(vcnt_ref)

    x = x_ref[...].astype(jnp.float32)          # (C, TN) logits for this pixel tile
    lab = lab_ref[...]                          # (1, TN) int32 labels
    pix, valid = _bce_terms(x, lab, num_classes, ignore_index)

    # defer the expensive full reduction: only cheap (1, TN) VPU accumulates per step
    acc_ref[...] += pix * valid
    vcnt_ref[...] += valid

    @pl.when(j == pl.num_programs(1) - 1)
    def _():
        loss_ref[...] = jnp.sum(acc_ref[...], keepdims=True)   # (1,1) per-batch loss sum
        cnt_ref[...] = jnp.sum(vcnt_ref[...], keepdims=True)   # (1,1) per-batch valid count


def _bce_map_kernel(x_ref, lab_ref, loss_ref, *, num_classes, ignore_index):
    x = x_ref[...].astype(jnp.float32)
    lab = lab_ref[...]
    pix, valid = _bce_terms(x, lab, num_classes, ignore_index)
    loss_ref[...] = pix * valid                 # lane-dense (1, TN) per-pixel masked loss


def _pick_tile(HW, C, x_itemsize):
    """Largest lane tile (multiple of 128) whose VMEM footprint stays under ~8 MiB."""
    hw128 = pl.cdiv(HW, 128) * 128
    # double-buffered logits + labels, plus (1, tn) f32 accumulators / output tile
    per_pixel = 2 * (C * x_itemsize + 4) + 3 * 4
    budget = 8 * 1024 * 1024
    cap = max(128, min(8192, (budget // per_pixel) // 128 * 128))
    return min(cap, hw128)


def bce_with_logits_ignore_index(inputs, targets, weight=None, *,
                                 ignore_index=255, reduction='mean', tn=None):
    """inputs: (B, C, H, W) logits (any float dtype); targets: (B, H, W) int labels in
    [0, C) or == ignore_index; weight: optional per-pixel (B, H, W) weights.
    reduction in {'mean', 'sum', 'none'}."""
    B, C, H, W = inputs.shape
    HW = H * W

    if tn is None:
        tn = _pick_tile(HW, C, jnp.dtype(inputs.dtype).itemsize)
    HW_pad = pl.cdiv(HW, tn) * tn
    nt = HW_pad // tn

    x = inputs.reshape(B, C, HW)                            # free reshape, native dtype
    lab = targets.reshape(B, 1, HW).astype(jnp.int32)
    if HW_pad != HW:
        # pad the pixel axis; padded pixels carry ignore_index so they are masked out
        x = jnp.pad(x, ((0, 0), (0, 0), (0, HW_pad - HW)))
        lab = jnp.pad(lab, ((0, 0), (0, 0), (0, HW_pad - HW)),
                      constant_values=ignore_index)

    in_specs = [pl.BlockSpec((None, C, tn), lambda b, j: (b, 0, j)),   # logits -> (C, tn)
                pl.BlockSpec((None, 1, tn), lambda b, j: (b, 0, j))]   # labels -> (1, tn)

    if reduction == 'none' or weight is not None:
        kernel = functools.partial(_bce_map_kernel, num_classes=C,
                                   ignore_index=ignore_index)
        loss_map = pl.pallas_call(
            kernel,
            out_shape=jax.ShapeDtypeStruct((B, 1, HW_pad), jnp.float32),
            grid_spec=pltpu.PrefetchScalarGridSpec(
                num_scalar_prefetch=0,
                grid=(B, nt),
                in_specs=in_specs,
                out_specs=pl.BlockSpec((None, 1, tn), lambda b, j: (b, 0, j)),
            ),
            compiler_params=pltpu.CompilerParams(
                dimension_semantics=("parallel", "parallel")),
        )(x, lab)
        loss_map = loss_map[:, 0, :HW].reshape(B, H, W)
        if weight is not None:
            loss_map = loss_map * weight
        if reduction == 'none':
            return loss_map
        total = jnp.sum(loss_map)
        if reduction == 'sum':
            return total
        valid = jnp.logical_and(targets != ignore_index, targets < C)
        return total / jnp.sum(valid.astype(jnp.float32))

    kernel = functools.partial(_bce_reduce_kernel, num_classes=C,
                               ignore_index=ignore_index)
    loss_parts, cnt_parts = pl.pallas_call(
        kernel,
        out_shape=(jax.ShapeDtypeStruct((B, 1, 1), jnp.float32),
                   jax.ShapeDtypeStruct((B, 1, 1), jnp.float32)),
        grid_spec=pltpu.PrefetchScalarGridSpec(
            num_scalar_prefetch=0,
            grid=(B, nt),
            in_specs=in_specs,
            out_specs=[pl.BlockSpec((None, 1, 1), lambda b, j: (b, 0, 0)),
                       pl.BlockSpec((None, 1, 1), lambda b, j: (b, 0, 0))],
            scratch_shapes=[pltpu.VMEM((1, tn), jnp.float32),
                            pltpu.VMEM((1, tn), jnp.float32)],
        ),
        compiler_params=pltpu.CompilerParams(
            dimension_semantics=("parallel", "arbitrary")),
    )(x, lab)

    total = jnp.sum(loss_parts)
    if reduction == 'sum':
        return total
    # reduction == 'mean': mean over valid (non-ignored) pixels only
    return total / jnp.sum(cnt_parts)


def _reference(inputs, targets, ignore_index=255, reduction='mean'):
    """Pure-JAX transcription of the PyTorch forward (weight=None)."""
    B, C, H, W = inputs.shape
    labels_new = jnp.where(targets != ignore_index, targets, C)
    oh = jax.nn.one_hot(labels_new, C + 1, dtype=jnp.float32)          # (B, H, W, C+1)
    oh = jnp.moveaxis(oh, -1, 1)[:, :C]                                # (B, C, H, W)
    x = inputs.astype(jnp.float32)
    bce = jnp.maximum(x, 0.0) - x * oh + jnp.log(1.0 + jnp.exp(-jnp.abs(x)))
    pix = bce.sum(axis=1)                                              # (B, H, W)
    valid = oh.sum(axis=1) != 0
    if reduction == 'none':
        return pix * valid.astype(jnp.float32)
    masked = jnp.where(valid, pix, 0.0)
    if reduction == 'sum':
        return jnp.sum(masked)
    return jnp.sum(masked) / jnp.sum(valid)


if __name__ == "__main__":
    key = jax.random.PRNGKey(0)
    k1, k2, k3, k4, k5 = jax.random.split(key, 5)

    # main check: (B, C, H, W) = (2, 4, 16, 16), reduction='mean'
    B, C, H, W = 2, 4, 16, 16
    inputs = jax.random.normal(k1, (B, C, H, W), dtype=jnp.float32)
    targets = jax.random.randint(k2, (B, H, W), 0, C, dtype=jnp.int32)
    ignore = jax.random.uniform(k3, (B, H, W)) < 0.1                   # some ignored pixels
    targets = jnp.where(ignore, 255, targets)

    out = jax.block_until_ready(bce_with_logits_ignore_index(inputs, targets))
    ref = _reference(inputs, targets)
    np.testing.assert_allclose(np.asarray(out), np.asarray(ref), rtol=1e-5, atol=1e-5)

    # per-pixel map path (reduction='none'), also exercises HW padding / odd C
    B2, C2, H2, W2 = 1, 3, 9, 11
    inp2 = jax.random.normal(k4, (B2, C2, H2, W2), dtype=jnp.float32)
    tgt2 = jax.random.randint(k5, (B2, H2, W2), 0, C2, dtype=jnp.int32)
    tgt2 = jnp.where(jax.random.uniform(k3, (B2, H2, W2)) < 0.2, 255, tgt2)

    out_map = jax.block_until_ready(
        bce_with_logits_ignore_index(inp2, tgt2, reduction='none'))
    ref_map = _reference(inp2, tgt2, reduction='none')
    np.testing.assert_allclose(np.asarray(out_map), np.asarray(ref_map),
                               rtol=1e-5, atol=1e-5)

    print("KERNEL_OK")
</pallas_src>

<mosaic_0001>
module attributes {stable_mosaic.version = 11 : i64} {
  func.func @_bce_reduce_kernel(%arg0: i32, %arg1: i32, %arg2: memref<1x4x256xf32, #tpu.memory_space<vmem>>, %arg3: memref<1x1x256xi32, #tpu.memory_space<vmem>>, %arg4: memref<1x1x1xf32, #tpu.memory_space<vmem>>, %arg5: memref<1x1x1xf32, #tpu.memory_space<vmem>>, %arg6: memref<1x256xf32, #tpu.memory_space<vmem>>, %arg7: memref<1x256xf32, #tpu.memory_space<vmem>>) attributes {dimension_semantics = [#tpu.dimension_semantics<parallel>, #tpu.dimension_semantics<arbitrary>], iteration_bounds = array<i64: 2, 1>, scalar_prefetch = 0 : i64, scratch_operands = 2 : i64, tpu.core_type = #tpu.core_type<tc>, window_params = [{transform_indices = @transform_0, window_bounds = array<i64: 1, 4, 256>}, {transform_indices = @transform_1, window_bounds = array<i64: 1, 1, 256>}, {transform_indices = @transform_2, window_bounds = array<i64: 1, 1, 1>}, {transform_indices = @transform_3, window_bounds = array<i64: 1, 1, 1>}]} {
    %c0_i32 = arith.constant 0 : i32
    %0 = arith.cmpi eq, %arg1, %c0_i32 : i32
    %1 = arith.extui %0 : i1 to i32
    %c0_i32_0 = arith.constant 0 : i32
    %2 = arith.cmpi ne, %1, %c0_i32_0 : i32
    scf.if %2 {
      %cst_19 = arith.constant 0.000000e+00 : f32
      %43 = vector.broadcast %cst_19 : f32 to vector<1x256xf32>
      %c0_20 = arith.constant 0 : index
      %c0_21 = arith.constant 0 : index
      %44 = vector.load %arg6[%c0_20, %c0_21] : memref<1x256xf32, #tpu.memory_space<vmem>>, vector<1x256xf32>
      tpu.vector_store %arg6[%c0_20, %c0_21], %43 {strides = array<i32>} : memref<1x256xf32, #tpu.memory_space<vmem>>, vector<1x256xf32>,
      %cst_22 = arith.constant 0.000000e+00 : f32
      %45 = vector.broadcast %cst_22 : f32 to vector<1x256xf32>
      %c0_23 = arith.constant 0 : index
      %c0_24 = arith.constant 0 : index
      %46 = vector.load %arg7[%c0_23, %c0_24] : memref<1x256xf32, #tpu.memory_space<vmem>>, vector<1x256xf32>
      tpu.vector_store %arg7[%c0_23, %c0_24], %45 {strides = array<i32>} : memref<1x256xf32, #tpu.memory_space<vmem>>, vector<1x256xf32>,
    } else {
    }
    %c0 = arith.constant 0 : index
    %c0_1 = arith.constant 0 : index
    %c0_2 = arith.constant 0 : index
    %3 = vector.load %arg2[%c0, %c0_1, %c0_2] : memref<1x4x256xf32, #tpu.memory_space<vmem>>, vector<1x4x256xf32>
    %4 = vector.shape_cast %3 : vector<1x4x256xf32> to vector<4x256xf32>
    %c0_3 = arith.constant 0 : index
    %c0_4 = arith.constant 0 : index
    %c0_5 = arith.constant 0 : index
    %5 = vector.load %arg3[%c0_3, %c0_4, %c0_5] : memref<1x1x256xi32, #tpu.memory_space<vmem>>, vector<1x1x256xi32>
    %6 = vector.shape_cast %5 : vector<1x1x256xi32> to vector<1x256xi32>
    %7 = tpu.iota {dimensions = array<i32: 0>} : vector<4x256xi32>
    %8 = vector.broadcast %6 : vector<1x256xi32> to vector<4x256xi32>
    %9 = arith.cmpi eq, %7, %8 : vector<4x256xi32>
    %10 = arith.extui %9 : vector<4x256xi1> to vector<4x256xi32>
    %11 = arith.sitofp %10 : vector<4x256xi32> to vector<4x256xf32>
    %c255_i32 = arith.constant 255 : i32
    %12 = vector.broadcast %c255_i32 : i32 to vector<1x256xi32>
    %13 = arith.cmpi ne, %6, %12 : vector<1x256xi32>
    %c4_i32 = arith.constant 4 : i32
    %14 = vector.broadcast %c4_i32 : i32 to vector<1x256xi32>
    %15 = arith.cmpi slt, %6, %14 : vector<1x256xi32>
    %16 = arith.andi %13, %15 : vector<1x256xi1>
    %17 = arith.extui %16 : vector<1x256xi1> to vector<1x256xi32>
    %18 = arith.sitofp %17 : vector<1x256xi32> to vector<1x256xf32>
    %cst = arith.constant 0.000000e+00 : f32
    %19 = vector.broadcast %cst : f32 to vector<4x256xf32>
    %20 = arith.maximumf %4, %19 : vector<4x256xf32>
    %21 = arith.mulf %4, %11 : vector<4x256xf32>
    %22 = arith.subf %20, %21 : vector<4x256xf32>
    %23 = math.absf %4 : vector<4x256xf32>
    %cst_6 = arith.constant 0.000000e+00 : f32
    %24 = vector.broadcast %cst_6 : f32 to vector<4x256xf32>
    %25 = arith.subf %24, %23 : vector<4x256xf32>
    %26 = math.exp %25 : vector<4x256xf32>
    %cst_7 = arith.constant 1.000000e+00 : f32
    %27 = vector.broadcast %cst_7 : f32 to vector<4x256xf32>
    %28 = arith.addf %27, %26 : vector<4x256xf32>
    %29 = math.log %28 : vector<4x256xf32>
    %30 = arith.addf %22, %29 : vector<4x256xf32>
    %cst_8 = arith.constant dense<0.000000e+00> : vector<256xf32>
    %31 = vector.multi_reduction <add>, %30, %cst_8 [0] : vector<4x256xf32> to vector<256xf32>
    %32 = vector.shape_cast %31 : vector<256xf32> to vector<1x256xf32>
    %c0_9 = arith.constant 0 : index
    %c0_10 = arith.constant 0 : index
    %33 = vector.load %arg6[%c0_9, %c0_10] : memref<1x256xf32, #tpu.memory_space<vmem>>, vector<1x256xf32>
    %34 = arith.mulf %32, %18 : vector<1x256xf32>
    %35 = arith.addf %33, %34 : vector<1x256xf32>
    %c0_11 = arith.constant 0 : index
    %c0_12 = arith.constant 0 : index
    %36 = vector.load %arg6[%c0_11, %c0_12] : memref<1x256xf32, #tpu.memory_space<vmem>>, vector<1x256xf32>
    tpu.vector_store %arg6[%c0_11, %c0_12], %35 {strides = array<i32>} : memref<1x256xf32, #tpu.memory_space<vmem>>, vector<1x256xf32>,
    %c0_13 = arith.constant 0 : index
    %c0_14 = arith.constant 0 : index
    %37 = vector.load %arg7[%c0_13, %c0_14] : memref<1x256xf32, #tpu.memory_space<vmem>>, vector<1x256xf32>
    %38 = arith.addf %37, %18 : vector<1x256xf32>
    %c0_15 = arith.constant 0 : index
    %c0_16 = arith.constant 0 : index
    %39 = vector.load %arg7[%c0_15, %c0_16] : memref<1x256xf32, #tpu.memory_space<vmem>>, vector<1x256xf32>
    tpu.vector_store %arg7[%c0_15, %c0_16], %38 {strides = array<i32>} : memref<1x256xf32, #tpu.memory_space<vmem>>, vector<1x256xf32>,
    %c0_i32_17 = arith.constant 0 : i32
    %40 = arith.cmpi eq, %arg1, %c0_i32_17 : i32
    %41 = arith.extui %40 : i1 to i32
    %c0_i32_18 = arith.constant 0 : i32
    %42 = arith.cmpi ne, %41, %c0_i32_18 : i32
    scf.if %42 {
      %c0_19 = arith.constant 0 : index
      %c0_20 = arith.constant 0 : index
      %43 = vector.load %arg6[%c0_19, %c0_20] : memref<1x256xf32, #tpu.memory_space<vmem>>, vector<1x256xf32>
      %44 = vector.shape_cast %43 : vector<1x256xf32> to vector<1x1x256xf32>
      %cst_21 = arith.constant dense<0.000000e+00> : vector<1xf32>
      %45 = vector.multi_reduction <add>, %44, %cst_21 [1, 2] : vector<1x1x256xf32> to vector<1xf32>
      %46 = vector.shape_cast %45 : vector<1xf32> to vector<1x1x1xf32>
      %47 = vector.extract %46[0, 0, 0] : f32 from vector<1x1x1xf32>
      %48 = vector.broadcast %47 : f32 to vector<1x1xf32>
      %c0_22 = arith.constant 0 : index
      %c0_23 = arith.constant 0 : index
      %c0_24 = arith.constant 0 : index
      %49 = vector.load %arg4[%c0_22, %c0_23, %c0_24] : memref<1x1x1xf32, #tpu.memory_space<vmem>>, vector<1x1x1xf32>
      %50 = vector.shape_cast %49 : vector<1x1x1xf32> to vector<1x1xf32>
      %51 = vector.shape_cast %48 : vector<1x1xf32> to vector<1x1x1xf32>
      tpu.vector_store %arg4[%c0_22, %c0_23, %c0_24], %51 {strides = array<i32>} : memref<1x1x1xf32, #tpu.memory_space<vmem>>, vector<1x1x1xf32>,
      %c0_25 = arith.constant 0 : index
      %c0_26 = arith.constant 0 : index
      %52 = vector.load %arg7[%c0_25, %c0_26] : memref<1x256xf32, #tpu.memory_space<vmem>>, vector<1x256xf32>
      %53 = vector.shape_cast %52 : vector<1x256xf32> to vector<1x1x256xf32>
      %cst_27 = arith.constant dense<0.000000e+00> : vector<1xf32>
      %54 = vector.multi_reduction <add>, %53, %cst_27 [1, 2] : vector<1x1x256xf32> to vector<1xf32>
      %55 = vector.shape_cast %54 : vector<1xf32> to vector<1x1x1xf32>
      %56 = vector.extract %55[0, 0, 0] : f32 from vector<1x1x1xf32>
      %57 = vector.broadcast %56 : f32 to vector<1x1xf32>
      %c0_28 = arith.constant 0 : index
      %c0_29 = arith.constant 0 : index
      %c0_30 = arith.constant 0 : index
      %58 = vector.load %arg5[%c0_28, %c0_29, %c0_30] : memref<1x1x1xf32, #tpu.memory_space<vmem>>, vector<1x1x1xf32>
      %59 = vector.shape_cast %58 : vector<1x1x1xf32> to vector<1x1xf32>
      %60 = vector.shape_cast %57 : vector<1x1xf32> to vector<1x1x1xf32>
      tpu.vector_store %arg5[%c0_28, %c0_29, %c0_30], %60 {strides = array<i32>} : memref<1x1x1xf32, #tpu.memory_space<vmem>>, vector<1x1x1xf32>,
    } else {
    }
    return
  }
  func.func @transform_0(%arg0: i32, %arg1: i32) -> (i32, i32, i32) {
    %c0_i32 = arith.constant 0 : i32
    %c0_i32_0 = arith.constant 0 : i32
    return %arg0, %c0_i32, %arg1 : i32, i32, i32
  }
  func.func @transform_1(%arg0: i32, %arg1: i32) -> (i32, i32, i32) {
    %c0_i32 = arith.constant 0 : i32
    %c0_i32_0 = arith.constant 0 : i32
    return %arg0, %c0_i32, %arg1 : i32, i32, i32
  }
  func.func @transform_2(%arg0: i32, %arg1: i32) -> (i32, i32, i32) {
    %c0_i32 = arith.constant 0 : i32
    %c0_i32_0 = arith.constant 0 : i32
    %c0_i32_1 = arith.constant 0 : i32
    return %arg0, %c0_i32, %c0_i32_0 : i32, i32, i32
  }
  func.func @transform_3(%arg0: i32, %arg1: i32) -> (i32, i32, i32) {
    %c0_i32 = arith.constant 0 : i32
    %c0_i32_0 = arith.constant 0 : i32
    %c0_i32_1 = arith.constant 0 : i32
    return %arg0, %c0_i32, %c0_i32_0 : i32, i32, i32
  }
}

</mosaic_0001>

<llo_original>
// kernel: tpu_custom_call.1
$region0: #{tpu_custom_call.1}
  #allocation0 [shape = 'u32[]', space=smem, size = 0x4, offset = 0x4, fixed_abs, tag = 'smem constant byte address 0x4 - core index']
  #allocation1 [shape = 'u32[72,128]{1,0:T(1,128)}', space=vmem, size = 0x9000, scoped, tag = 'internal scratch']
  #allocation2 [shape = 'f32[1,256]{1,0:T(1,128)}', space=vmem, size = 0x400, scoped, tag = 'scratch operand']
  #allocation3 [shape = 'f32[1,256]{1,0:T(1,128)}', space=vmem, size = 0x400, scoped, tag = 'scratch operand']
  %s0 = inlined_call_operand.hbm [shape: f32[2,4,256], index: 0, kind: input, shape index: {}]
  %s1 = inlined_call_operand.hbm [shape: s32[2,1,256], index: 1, kind: input, shape index: {}]
  %s2 = inlined_call_operand.vmem [shape: f32[2,1,1], index: 2, kind: output, shape index: {0}]
  %s3 = inlined_call_operand.vmem [shape: f32[2,1,1], index: 3, kind: output, shape index: {1}]
  %4 = xla_tuple %s2, %s3
  %s5 = sld [smem:[#allocation0]]
  $region65: #{tpu_custom_call.1} parent=0
    _
  %s7 = ssub.s32 1, %s5
  %s8 = scalar_select 0, %s7, %s5
  $region1: #{tpu_custom_call.1} parent=0
    #allocation4 [shape = 'u8[8192]{0}', space=vmem, size = 0x2000, scoped, tag = 'input window, operand 0']
    #allocation5 [shape = 's32[2]{0}', space=sflag, size = 0x8, scoped, tag = 'scoped memory for tpu_custom_call.1']
    #allocation6 [shape = 'u8[2048]{0}', space=vmem, size = 0x800, scoped, tag = 'input window, operand 1']
    #allocation7 [shape = 's32[2]{0}', space=sflag, size = 0x8, scoped, tag = 'scoped memory for tpu_custom_call.1']
    %9 = vsyncpa [#allocation5], 0
    %s10 = scalar_lea.sflag [#allocation5], 1
    %11 = vsyncpa %s10, 0
    %12 = vsyncpa [#allocation7], 0
    %s13 = scalar_lea.sflag [#allocation7], 1
    %14 = vsyncpa %s13, 0
    loop: start=0, step=1, limit=4
    $region2: #{tpu_custom_call.1} parent=1 // loop_pre_header
      _
    $region3: #{tpu_custom_call.1} parent=1 // loop_header
      %s16 = sphi 0, %s20
      %p17 = scmp.ge.s32.totalorder %s16, 4
      %s23 = sphi 0, %s35
      %s24 = sphi 0, %s31
      %s25 = sphi 0, %s23
      %s26 = sphi 0, %s24
      %s27 = sphi 0, %s25
      %s28 = sphi 0, %s26
      %s40 = sphi 0, %s42
      %s43 = sphi 0, %s40
      %s44 = sphi 0, %s43
      %s60 = sphi 0, %s44
      %s68 = sphi 0, %s70
      %s71 = sphi 0, %s68
      %s72 = sphi 0, %s71
      %s88 = sphi 0, %s72
      %s94 = sphi 0, %s96
      %s97 = sphi 0, %s94
      %s98 = sphi 0, %s97
      %s114 = sphi 0, %s98
      %s120 = sphi 0, %s122
      %s123 = sphi 0, %s120
      %s124 = sphi 0, %s123
      %s140 = sphi 0, %s124
    $region4: #{tpu_custom_call.1} parent=1 // loop_header_branch
      %19 = sbr.rel (%p17) target = $region8
    $region5: #{tpu_custom_call.1} parent=1 // loop_body
      %s21 = ssub.s32 %s16, 1
      %s22 = ssub.s32 %s16, 2
      %s29 = sadd.s32 1, %s24
      %p30 = scmp.ge.s32.totalorder %s29, 1
      %s31 = scalar_select %p30, 0, %s29
      %s32 = sadd.s32 1, %s23
      %s33 = scalar_select %p30, %s32, %s23
      %p34 = scmp.ge.s32.totalorder %s33, 2
      %s35 = scalar_select %p34, 0, %s33
      %s36 = ssub.s32 %s23, %s35
      %s37 = ssub.s32 %s24, %s31
      %s38 = sor.u32 %s36, %s37
      %p39 = scmp.eq.s32.totalorder %s38, 0
      %s41 = sadd.s32 %s40, 1
      %s42 = scalar_select %p39, %s40, %s41
      %p45 = pneg %p39
      %p46 = scmp.eq.s32.totalorder %s16, 1
      %p47 = por %p45, %p46
      %p48 = scmp.ne.s32.totalorder %s40, %s43
      %p49 = scmp.eq.s32.totalorder %s16, 0
      %p50 = por %p48, %p49
      %p51 = scmp.ne.s32.totalorder %s40, %s43
      %p52 = scmp.eq.s32.totalorder %s21, 1
      %p53 = por %p51, %p52
      %p54 = scmp.ne.s32.totalorder %s43, %s44
      %p55 = scmp.eq.s32.totalorder %s21, 0
      %p56 = por %p54, %p55
      %p57 = scmp.ne.s32.totalorder %s43, %s44
      %p58 = scmp.eq.s32.totalorder %s22, 1
      %p59 = por %p57, %p58
      %p61 = scmp.ne.s32.totalorder %s44, %s60
      %p62 = scmp.eq.s32.totalorder %s22, 0
      %p63 = por %p61, %p62
      %s64 = ssub.s32 %s23, %s35
      %s65 = ssub.s32 %s24, %s31
      %s66 = sor.u32 %s64, %s65
      %p67 = scmp.eq.s32.totalorder %s66, 0
      %s69 = sadd.s32 %s68, 1
      %s70 = scalar_select %p67, %s68, %s69
      %p73 = pneg %p67
      %p74 = scmp.eq.s32.totalorder %s16, 1
      %p75 = por %p73, %p74
      %p76 = scmp.ne.s32.totalorder %s68, %s71
      %p77 = scmp.eq.s32.totalorder %s16, 0
      %p78 = por %p76, %p77
      %p79 = scmp.ne.s32.totalorder %s68, %s71
      %p80 = scmp.eq.s32.totalorder %s21, 1
      %p81 = por %p79, %p80
      %p82 = scmp.ne.s32.totalorder %s71, %s72
      %p83 = scmp.eq.s32.totalorder %s21, 0
      %p84 = por %p82, %p83
      %p85 = scmp.ne.s32.totalorder %s71, %s72
      %p86 = scmp.eq.s32.totalorder %s22, 1
      %p87 = por %p85, %p86
      %p89 = scmp.ne.s32.totalorder %s72, %s88
      %p90 = scmp.eq.s32.totalorder %s22, 0
      %p91 = por %p89, %p90
      %s92 = ssub.s32 %s23, %s35
      %p93 = scmp.eq.s32.totalorder %s92, 0
      %s95 = sadd.s32 %s94, 1
      %s96 = scalar_select %p93, %s94, %s95
      %p99 = pneg %p93
      %p100 = scmp.eq.s32.totalorder %s16, 1
      %p101 = por %p99, %p100
      %p102 = scmp.ne.s32.totalorder %s94, %s97
      %p103 = scmp.eq.s32.totalorder %s16, 0
      %p104 = por %p102, %p103
      %p105 = scmp.ne.s32.totalorder %s94, %s97
      %p106 = scmp.eq.s32.totalorder %s21, 1
      %p107 = por %p105, %p106
      %p108 = scmp.ne.s32.totalorder %s97, %s98
      %p109 = scmp.eq.s32.totalorder %s21, 0
      %p110 = por %p108, %p109
      %p111 = scmp.ne.s32.totalorder %s97, %s98
      %p112 = scmp.eq.s32.totalorder %s22, 1
      %p113 = por %p111, %p112
      %p115 = scmp.ne.s32.totalorder %s98, %s114
      %p116 = scmp.eq.s32.totalorder %s22, 0
      %p117 = por %p115, %p116
      %s118 = ssub.s32 %s23, %s35
      %p119 = scmp.eq.s32.totalorder %s118, 0
      %s121 = sadd.s32 %s120, 1
      %s122 = scalar_select %p119, %s120, %s121
      %p125 = pneg %p119
      %p126 = scmp.eq.s32.totalorder %s16, 1
      %p127 = por %p125, %p126
      %p128 = scmp.ne.s32.totalorder %s120, %s123
      %p129 = scmp.eq.s32.totalorder %s16, 0
      %p130 = por %p128, %p129
      %p131 = scmp.ne.s32.totalorder %s120, %s123
      %p132 = scmp.eq.s32.totalorder %s21, 1
      %p133 = por %p131, %p132
      %p134 = scmp.ne.s32.totalorder %s123, %s124
      %p135 = scmp.eq.s32.totalorder %s21, 0
      %p136 = por %p134, %p135
      %p137 = scmp.ne.s32.totalorder %s123, %s124
      %p138 = scmp.eq.s32.totalorder %s22, 1
      %p139 = por %p137, %p138
      %p141 = scmp.ne.s32.totalorder %s124, %s140
      %p142 = scmp.eq.s32.totalorder %s22, 0
      %p143 = por %p141, %p142
      %p144 = scmp.le.s32.totalorder 1, %s16
      %p145 = scmp.lt.s32.totalorder %s16, 3
      %p146 = pnand %p144, %p145
      %p147 = pneg %p146
      // Predicated region
      $region9: #{tpu_custom_call.1} parent=5 // pred_check
        _
      $region10: #{tpu_custom_call.1} parent=5 // pred_check_branch
        %149 = sbr.rel (%p146) target = $region12
      $region11: #{tpu_custom_call.1} parent=5 // pred_region
        %s150 = ssub.s32 %s16, 1
      $region12: #{tpu_custom_call.1} parent=5 // pred_fallthru
        _
      %p151 = scmp.lt.s32.totalorder %s16, 2
      // Predicated region
      $region13: #{tpu_custom_call.1} parent=5 // pred_check
        %p152 = pneg %p151
      $region14: #{tpu_custom_call.1} parent=5 // pred_check_branch
        %154 = sbr.rel (%p152) target = $region16
      $region15: #{tpu_custom_call.1} parent=5 // pred_region
        // Predicated region
        $region17: #{tpu_custom_call.1} parent=15 // pred_check
          %p155 = pneg %p50
        $region18: #{tpu_custom_call.1} parent=15 // pred_check_branch
          %157 = sbr.rel (%p155) target = $region20
        $region19: #{tpu_custom_call.1} parent=15 // pred_region
          %s158 = sand.u32 %s40, 1
          %s159 = scalar_lea.sflag [#allocation5], %s158
          %s160 = sand.u32 %s40, 1
          %s161 = smul.addr %s160, 8
          %s162 = scalar_lea.vmem [#allocation4], %s161
          %s163 = smul.u32 2, %s24
          %165 = vsyncadd %s159, 0
          %s166 = smul.addr %s23, 2
          %s167 = sadd.s32 %s163, %s166
          %s168 = smul.addr %s167, 4
          %s169 = scalar_lea.hbm %s0, %s168
          %s171 = sshll.u32 %s169, 4
          %s172 = int_to_ptr.hbm [resolvable:$true] %s171
          %s173 = sshll.u32 %s162, 4
          %s174 = int_to_ptr.vmem [resolvable:$true] %s173
          %176 = dma.hbm_to_vmem [thread:$0]  %s172, 128, %s174, %s159
        $region20: #{tpu_custom_call.1} parent=15 // pred_fallthru
          _
        // Predicated region
        $region21: #{tpu_custom_call.1} parent=15 // pred_check
          %p177 = pneg %p78
        $region22: #{tpu_custom_call.1} parent=15 // pred_check_branch
          %179 = sbr.rel (%p177) target = $region24
        $region23: #{tpu_custom_call.1} parent=15 // pred_region
          %s180 = sand.u32 %s68, 1
          %s181 = scalar_lea.sflag [#allocation7], %s180
          %s182 = sand.u32 %s68, 1
          %s183 = smul.addr %s182, 2
          %s184 = scalar_lea.vmem [#allocation6], %s183
          %s185 = smul.u32 2, %s24
          %187 = vsyncadd %s181, 0
          %s188 = smul.addr %s23, 2
          %s189 = sadd.s32 %s185, %s188
          %s190 = scalar_lea.hbm %s1, %s189
          %s192 = sshll.u32 %s190, 4
          %s193 = int_to_ptr.hbm [resolvable:$true] %s192
          %s194 = sshll.u32 %s184, 4
          %s195 = int_to_ptr.vmem [resolvable:$true] %s194
          %197 = dma.hbm_to_vmem [thread:$0]  %s193, 32, %s195, %s181
        $region24: #{tpu_custom_call.1} parent=15 // pred_fallthru
          _
      $region16: #{tpu_custom_call.1} parent=5 // pred_fallthru
        _
      %p198 = scmp.le.s32.totalorder 1, %s16
      %p199 = scmp.lt.s32.totalorder %s16, 3
      %p200 = pnand %p198, %p199
      %p201 = pneg %p200
      // Predicated region
      $region25: #{tpu_custom_call.1} parent=5 // pred_check
        _
      $region26: #{tpu_custom_call.1} parent=5 // pred_check_branch
        %203 = sbr.rel (%p200) target = $region28
      $region27: #{tpu_custom_call.1} parent=5 // pred_region
        %s204 = ssub.s32 %s16, 1
        %s205 = sand.u32 %s43, 1
        %s206 = scalar_lea.sflag [#allocation5], %s205
        %s207 = sand.u32 %s43, 1
        %s208 = smul.addr %s207, 8
        %s209 = scalar_lea.vmem [#allocation4], %s208
        // Predicated region
        $region29: #{tpu_custom_call.1} parent=27 // pred_check
          %p210 = pneg %p56
        $region30: #{tpu_custom_call.1} parent=27 // pred_check_branch
          %212 = sbr.rel (%p210) target = $region32
        $region31: #{tpu_custom_call.1} parent=27 // pred_region
          %214 = dma.done %s206, 128
        $region32: #{tpu_custom_call.1} parent=27 // pred_fallthru
          _
        %s215 = sand.u32 %s71, 1
        %s216 = scalar_lea.sflag [#allocation7], %s215
        %s217 = sand.u32 %s71, 1
        %s218 = smul.addr %s217, 2
        %s219 = scalar_lea.vmem [#allocation6], %s218
        // Predicated region
        $region33: #{tpu_custom_call.1} parent=27 // pred_check
          %p220 = pneg %p84
        $region34: #{tpu_custom_call.1} parent=27 // pred_check_branch
          %222 = sbr.rel (%p220) target = $region36
        $region35: #{tpu_custom_call.1} parent=27 // pred_region
          %224 = dma.done %s216, 32
        $region36: #{tpu_custom_call.1} parent=27 // pred_fallthru
          _
        %s225 = sand.u32 %s43, 1
        %s226 = scalar_lea.sflag [#allocation5], %s225
        %s227 = sand.u32 %s43, 1
        %s228 = smul.addr %s227, 8
        %s229 = scalar_lea.vmem [#allocation4], %s228
        %p230 = pneg %p56
        %p231 = pneg %p53
        %s232 = sand.u32 %s71, 1
        %s233 = scalar_lea.sflag [#allocation7], %s232
        %s234 = sand.u32 %s71, 1
        %s235 = smul.addr %s234, 2
        %s236 = scalar_lea.vmem [#allocation6], %s235
        %p237 = pneg %p84
        %p238 = pneg %p81
        %p239 = pneg %p110
        %p240 = pneg %p107
        %p241 = scmp.lt.s32.totalorder %s25, 1
        %s242 = scalar_select %p241, %s25, 1
        %s243 = scalar_lea.vmem %s2, %s242
        %p244 = pneg %p136
        %p245 = pneg %p133
        %p246 = scmp.lt.s32.totalorder %s25, 1
        %s247 = scalar_select %p246, %s25, 1
        %s248 = scalar_lea.vmem %s3, %s247
        %s249 = smul.u32 2, %s26
        %s250 = smul.u32 2, %s26
        %p251 = scmp.lt.s32.totalorder %s25, 1
        %s252 = scalar_select %p251, %s25, 1
        %s253 = scalar_lea.vmem %s2, %s252
        %p254 = scmp.lt.s32.totalorder %s25, 1
        %s255 = scalar_select %p254, %s25, 1
        %s256 = scalar_lea.vmem %s3, %s255
        %p257 = scmp.eq.s32.totalorder %s26, 0
        // Predicated region
        $region37: #{tpu_custom_call.1} parent=27 // pred_check
          %p258 = pneg %p257
        $region38: #{tpu_custom_call.1} parent=27 // pred_check_branch
          %260 = sbr.rel (%p258) target = $region40
        $region39: #{tpu_custom_call.1} parent=27 // pred_region
          %v261 = vlaneseq
          %vm262 = vcmp.ge.s32.totalorder %v261, 0
          %vm263 = vcmp.lt.s32.totalorder %v261, 256
          %vm264 = vmand %vm262, %vm263
          %265 = vst.msk [vmem:[#allocation2] sm:$0x3] %vm264, 0.0
          %266 = vst.msk [vmem:[#allocation3] sm:$0x3] %vm264, 0.0
        $region40: #{tpu_custom_call.1} parent=27 // pred_fallthru
          _
        %v267 = vld [vmem:[%s209] sm:$0xff]
        %v268 = vld [vmem:[%s219] sm:$0x3]
        %v269 = vlaneseq
        %v270 = vshrl.u32 %v269, 7
        %v271 = vperm.slane %v268, 0
        %v272 = vperm.slane %v268, 1
        %vm273 = vcmp.eq.s32.totalorder %v270, %v271
        %vm274 = vcmp.eq.s32.totalorder %v270, %v272
        %v275 = vsel %vm273, 1, 0
        %v276 = vsel %vm274, 1, 0
        %v277 = vcvt.s32.f32 %v275
        %v278 = vcvt.s32.f32 %v276
        %vm279 = vcmp.ne.s32.totalorder %v268, 255
        %vm280 = vcmp.lt.s32.totalorder %v268, 4
        %vm281 = vmand %vm279, %vm280
        %v282 = vsel %vm281, 1, 0
        %v283 = vcvt.s32.f32 %v282
        %v284 = vmax.f32 %v267, 0.0
        %v287 = vrot.slane %v278, 4
        %vm288 = vcmask 1043456
        %v289 = vsel %vm288, %v277, %v287
        %v291 = vmul.f32 %v267, %v289
        %v292 = vsub.f32 %v284, %v291
        %v293 = vand.u32 2147483647, %v267
        %v294 = vsub.f32 0.0, %v293
        %v295 = vmul.f32 %v294, 1.442695
        %v296 = vpow.pop %v295
        %v297 = vadd.f32 %v296, 1.0
        %v298 = vlog2.pop %v297
        %v299 = vmul.f32 %v298, 0.6931472
        %v300 = vadd.f32 %v292, %v299
        %302 = vst [vmem:[#allocation1] ss:$2 sm:$0xff] %v300
        %v303 = vld.sshfl [vmem:[#allocation1] sm:$0xff pattern:$0x75316420]
        %v304 = vld.sshfl [vmem:[#allocation1 + $0x8] sm:$0xff pattern:$0x75316420]
        %v307 = vsel %vm288, %v303, 0.0
        %v308 = vrot.slane %v307, 4
        %v309 = vadd.f32 %v307, %v308
        %v310 = vrot.slane %v309, 2
        %v311 = vadd.f32 %v309, %v310
        %v312 = vrot.slane %v311, 1
        %v313 = vadd.f32 %v311, %v312
        %v314 = vsel %vm288, %v304, 0.0
        %v315 = vrot.slane %v314, 4
        %v316 = vadd.f32 %v314, %v315
        %v317 = vrot.slane %v316, 2
        %v318 = vadd.f32 %v316, %v317
        %v319 = vrot.slane %v318, 1
        %v320 = vadd.f32 %v318, %v319
        %v321 = vld [vmem:[#allocation2] sm:$0x3]
        %v323 = vperm.slane %v283, 0
        %v324 = vperm.slane %v283, 1
        %v327 = vmul.f32 %v313, %v323
        %v328 = vmul.f32 %v320, %v324
        %v331 = vrot.slane %v328, 7
        %vm332 = vcmask 1040384
        %v333 = vsel %vm332, %v327, %v331
        %v335 = vadd.f32 %v321, %v333
        %v336 = vlaneseq
        %vm337 = vcmp.ge.s32.totalorder %v336, 0
        %vm338 = vcmp.lt.s32.totalorder %v336, 256
        %vm339 = vmand %vm337, %vm338
        %340 = vst.msk [vmem:[#allocation2] sm:$0x3] %vm339, %v335
        %v341 = vld [vmem:[#allocation3] sm:$0x3]
        %v342 = vadd.f32 %v341, %v283
        %343 = vst.msk [vmem:[#allocation3] sm:$0x3] %vm339, %v342
        // Predicated region
        $region41: #{tpu_custom_call.1} parent=27 // pred_check
          %p344 = pneg %p257
        $region42: #{tpu_custom_call.1} parent=27 // pred_check_branch
          %346 = sbr.rel (%p344) target = $region44
        $region43: #{tpu_custom_call.1} parent=27 // pred_region
          %v347 = vld [vmem:[#allocation2] sm:$0x3]
          %v349 = vperm.slane %v347, 0
          %v350 = vperm.slane %v347, 1
          %v353 = vsel %vm332, %v349, 0.0
          %v354 = vsel %vm332, %v350, 0.0
          %v355 = vadd.f32 %v353, %v354
          %356 = vadd.xlane.f32.xlu0 %v355
          %v357 = vpop.xlane.xlu0 %356
          %v358 = vrot.slane %v357, 4
          %v359 = vadd.f32 %v357, %v358
          %v360 = vrot.slane %v359, 2
          %v361 = vadd.f32 %v359, %v360
          %v362 = vrot.slane %v361, 1
          %v363 = vadd.f32 %v361, %v362
          %s364 = vtos %v363
          %v365 = vstv %s364
          %vm366 = vcmask 0
          %367 = vst.msk [vmem:[%s253] sm:$0x1] %vm366, %v365
          %v368 = vld [vmem:[#allocation3] sm:$0x3]
          %v370 = vperm.slane %v368, 0
          %v371 = vperm.slane %v368, 1
          %v374 = vsel %vm332, %v370, 0.0
          %v375 = vsel %vm332, %v371, 0.0
          %v376 = vadd.f32 %v374, %v375
          %377 = vadd.xlane.f32.xlu0 %v376
          %v378 = vpop.xlane.xlu0 %377
          %v379 = vrot.slane %v378, 4
          %v380 = vadd.f32 %v378, %v379
          %v381 = vrot.slane %v380, 2
          %v382 = vadd.f32 %v380, %v381
          %v383 = vrot.slane %v382, 1
          %v384 = vadd.f32 %v382, %v383
          %s385 = vtos %v384
          %v386 = vstv %s385
          %387 = vst.msk [vmem:[%s256] sm:$0x1] %vm366, %v386
        $region44: #{tpu_custom_call.1} parent=27 // pred_fallthru
          _
        %p388 = scmp.lt.s32.totalorder %s25, 1
        %s389 = scalar_select %p388, %s25, 1
        %s390 = scalar_lea.vmem %s2, %s389
        %p391 = scmp.lt.s32.totalorder %s25, 1
        %s392 = scalar_select %p391, %s25, 1
        %s393 = scalar_lea.vmem %s3, %s392
        // Predicated region
        $region45: #{tpu_custom_call.1} parent=27 // pred_check
          %p394 = pneg %p107
        $region46: #{tpu_custom_call.1} parent=27 // pred_check_branch
          %396 = sbr.rel (%p394) target = $region48
        $region47: #{tpu_custom_call.1} parent=27 // pred_region
          _
        $region48: #{tpu_custom_call.1} parent=27 // pred_fallthru
          _
        // Predicated region
        $region49: #{tpu_custom_call.1} parent=27 // pred_check
          %p397 = pneg %p133
        $region50: #{tpu_custom_call.1} parent=27 // pred_check_branch
          %399 = sbr.rel (%p397) target = $region52
        $region51: #{tpu_custom_call.1} parent=27 // pred_region
          _
        $region52: #{tpu_custom_call.1} parent=27 // pred_fallthru
          _
      $region28: #{tpu_custom_call.1} parent=5 // pred_fallthru
        _
      %p400 = scmp.le.s32.totalorder 2, %s16
      // Predicated region
      $region53: #{tpu_custom_call.1} parent=5 // pred_check
        %p401 = pneg %p400
      $region54: #{tpu_custom_call.1} parent=5 // pred_check_branch
        %403 = sbr.rel (%p401) target = $region56
      $region55: #{tpu_custom_call.1} parent=5 // pred_region
        %s404 = ssub.s32 %s16, 2
        // Predicated region
        $region57: #{tpu_custom_call.1} parent=55 // pred_check
          %p405 = pneg %p113
        $region58: #{tpu_custom_call.1} parent=55 // pred_check_branch
          %407 = sbr.rel (%p405) target = $region60
        $region59: #{tpu_custom_call.1} parent=55 // pred_region
          %p408 = scmp.lt.s32.totalorder %s27, 1
          %s409 = scalar_select %p408, %s27, 1
          %s410 = scalar_lea.vmem %s2, %s409
        $region60: #{tpu_custom_call.1} parent=55 // pred_fallthru
          _
        // Predicated region
        $region61: #{tpu_custom_call.1} parent=55 // pred_check
          %p411 = pneg %p139
        $region62: #{tpu_custom_call.1} parent=55 // pred_check_branch
          %413 = sbr.rel (%p411) target = $region64
        $region63: #{tpu_custom_call.1} parent=55 // pred_region
          %p414 = scmp.lt.s32.totalorder %s27, 1
          %s415 = scalar_select %p414, %s27, 1
          %s416 = scalar_lea.vmem %s3, %s415
        $region64: #{tpu_custom_call.1} parent=55 // pred_fallthru
          _
      $region56: #{tpu_custom_call.1} parent=5 // pred_fallthru
        _
    $region6: #{tpu_custom_call.1} parent=1 // loop_footer
      %s20 = sadd.s32 1, %s16
    $region7: #{tpu_custom_call.1} parent=1 // loop_footer_branch
      %15 = sbr.rel target = $region3
    $region8: #{tpu_custom_call.1} parent=1 // loop_exit
      _
    %417 = vsyncpa [#allocation5], 1
    %s418 = scalar_lea.sflag [#allocation5], 1
    %419 = vsyncpa %s418, 1
    %420 = vsyncpa [#allocation7], 1
    %s421 = scalar_lea.sflag [#allocation7], 1
    %422 = vsyncpa %s421, 1

</llo_original>
